<compile_context>
chip_gen: v7x
topology: tpu7x:2x2x1
jax: 0.10.0
libtpu: 0.0.40
codegen_flags: <defaults>
</compile_context>

<pallas_src>
import functools

import jax
import jax.numpy as jnp
from jax.experimental import pallas as pl
from jax.experimental.pallas import tpu as pltpu

BN_EPS = 1e-5
LANE = 128
MAX_BLOCK_ROWS = 512            # row-tile cap: amortizes per-step overhead, bounds VMEM
MEGACORE_MIN_ROWS = 256         # only split a single row block for v7x's 2 TCs when n >= this
VMEM_BUDGET = 48 * 1024 * 1024  # headroom under v7x's 64 MiB physical VMEM


def _round_up(x, m):
    return (x + m - 1) // m * m


def _sublane(dtype):
    # Minimum second-minor tile multiple per dtype (f32: 8, bf16: 16, int8/fp8: 32).
    return {4: 8, 2: 16, 1: 32}[jnp.dtype(dtype).itemsize]


# ---------------------------------------------------------------------------
# Fused decoder kernel (whole MLP in one pallas_call)
# ---------------------------------------------------------------------------
def _make_decoder_kernel(n_layers):
    def kernel(*refs):
        # refs = (x_ref, w0, b0, w1, b1, ..., o_ref); weights already BN-folded,
        # transposed to (f_in, f_out), lane-padded, and stored as bf16.
        x_ref = refs[0]
        o_ref = refs[-1]
        h = x_ref[...].astype(jnp.float32)
        for i in range(n_layers):
            w = refs[1 + 2 * i][...]
            b = refs[2 + 2 * i][...]
            # bf16 operands feed the MXU; accumulation stays f32; bias-add and
            # SiLU stay in f32 (v5e has no bf16 VPU/EUP path).
            h = jnp.dot(h.astype(w.dtype), w, preferred_element_type=jnp.float32) + b
            if i != n_layers - 1:
                # BatchNorm folded into (w, b); Dropout = identity (eval mode).
                h = h * jax.nn.sigmoid(h)
        o_ref[...] = h.astype(o_ref.dtype)

    return kernel


# ---------------------------------------------------------------------------
# Parameter init (PyTorch-shaped) + one-time host-side prep
# ---------------------------------------------------------------------------
def init_decoder_params(key, dimensions):
    """Deterministic synthetic params with the shapes nn.Linear / BatchNorm1d use."""
    params = []
    n_layers = len(dimensions) - 1
    for i, (f_in, f_out) in enumerate(zip(dimensions[:-1], dimensions[1:])):
        key, kw, kb, km, kv, kg, kbeta = jax.random.split(key, 7)
        bound = 1.0 / jnp.sqrt(jnp.float32(f_in))
        # PyTorch stores Linear weight as (out, in).
        w = jax.random.uniform(kw, (f_out, f_in), jnp.float32, -bound, bound)
        b = jax.random.uniform(kb, (f_out,), jnp.float32, -bound, bound)
        layer = {"w": w, "b": b}
        if i != n_layers - 1:
            layer["bn_gamma"] = 1.0 + 0.1 * jax.random.normal(kg, (f_out,), jnp.float32)
            layer["bn_beta"] = 0.1 * jax.random.normal(kbeta, (f_out,), jnp.float32)
            layer["bn_mean"] = 0.1 * jax.random.normal(km, (f_out,), jnp.float32)
            layer["bn_var"] = jax.random.uniform(kv, (f_out,), jnp.float32, 0.5, 1.5)
        params.append(layer)
    return params


def prepare_decoder_params(params, compute_dtype=jnp.bfloat16):
    """Fold eval-mode BN into Linear, transpose to (f_in, f_out), pad outputs to 128.

    Done once, outside jit.  Padding is with zeros, so padded features contribute
    nothing and padded output columns stay exactly zero through SiLU (SiLU(0)==0)
    and all later layers.  Layer 0's input dim is left UN-padded so the raw x can
    be fed without a wrapper-side feature pad; layers i>0 have their input dim
    padded to match the previous layer's padded output width.
    """
    n_layers = len(params)
    ws, bs = [], []
    prev_out_pad = None
    for i, p in enumerate(params):
        w = p["w"].astype(jnp.float32)  # (f_out, f_in)
        b = p["b"].astype(jnp.float32)  # (f_out,)
        if i != n_layers - 1:
            s = p["bn_gamma"] / jnp.sqrt(p["bn_var"] + BN_EPS)
            w = w * s[:, None]
            b = (b - p["bn_mean"]) * s + p["bn_beta"]
        w_t = w.T  # (f_in, f_out) -> plain x @ W on the MXU
        f_in, f_out = w_t.shape
        f_in_pad = f_in if i == 0 else prev_out_pad
        f_out_pad = _round_up(f_out, LANE)
        w_pad = jnp.zeros((f_in_pad, f_out_pad), jnp.float32).at[:f_in, :f_out].set(w_t)
        b_pad = jnp.zeros((1, f_out_pad), jnp.float32).at[0, :f_out].set(b)
        # bf16 matmul operands (MXU-native); f32 accumulation happens in-kernel.
        ws.append(w_pad.astype(compute_dtype))
        bs.append(b_pad)  # bias stays f32 (added post-accumulation)
        prev_out_pad = f_out_pad
    return tuple(ws), tuple(bs)


# ---------------------------------------------------------------------------
# Forward
# ---------------------------------------------------------------------------
@functools.partial(jax.jit, static_argnames=("out_features",))
def decoder_forward_pallas(x, ws, bs, *, out_features):
    # Note: at tiny batch (e.g. 10 rows) this kernel is launch/overhead bound;
    # if the decoder is called repeatedly, stack calls along rows into one
    # pallas_call rather than shrinking tiles.
    n_layers = len(ws)
    n, f_in = x.shape
    assert ws[0].shape[0] == f_in, "prepared weights don't match x feature dim"
    f_out_pad = ws[-1].shape[1]

    sublane = _sublane(x.dtype)      # dtype-aware sublane multiple (f32: 8, bf16: 16)
    n_pad8 = _round_up(n, sublane)

    # Balanced row blocks: never round n up to a whole extra (mostly-padding) block.
    num_blocks = pl.cdiv(n_pad8, MAX_BLOCK_ROWS)
    # v7x megacore: a grid of length 1 leaves the second TensorCore idle; split
    # only when the per-step matmuls are big enough for the extra step to pay off.
    if num_blocks == 1 and n >= MEGACORE_MIN_ROWS:
        num_blocks = 2
    block_rows = _round_up(pl.cdiv(n_pad8, num_blocks), sublane)

    # --- VMEM budget guard (v7x physical VMEM is only 64 MiB) ---------------
    def vmem_estimate(rows):
        inputs = 2 * rows * f_in * x.dtype.itemsize              # double-buffered in tile
        outputs = 2 * rows * f_out_pad * x.dtype.itemsize        # double-buffered out tile
        weights = sum(int(w.size) * w.dtype.itemsize for w in ws)  # Buffered(1): one copy
        biases = sum(int(b.size) * b.dtype.itemsize for b in bs)
        widest = max(int(w.shape[1]) for w in ws)
        intermediates = 3 * rows * widest * 4                     # live f32 h / bf16 / acc
        return inputs + outputs + weights + biases + intermediates

    while vmem_estimate(block_rows) > VMEM_BUDGET and block_rows > sublane:
        num_blocks *= 2
        block_rows = _round_up(pl.cdiv(n_pad8, num_blocks), sublane)
    # TODO(synk): K-tile the resident weight stack if even single-sublane row
    # blocks don't fit (not reachable at these dimensions).
    assert vmem_estimate(block_rows) <= VMEM_BUDGET, "decoder weights exceed VMEM budget"

    n_pad = num_blocks * block_rows
    x_pad = x if n_pad == n else jnp.pad(x, ((0, n_pad - n), (0, 0)))  # rows only; no feature pad

    in_specs = [pl.BlockSpec((block_rows, f_in), lambda i: (i, 0))]
    args = [x_pad]
    for w, b in zip(ws, bs):
        # Grid-invariant operands: constant index_map + single buffer (half the
        # resident footprint, no pointless re-DMA bookkeeping across grid steps).
        in_specs.append(pl.BlockSpec(w.shape, lambda i: (0, 0), pipeline_mode=pl.Buffered(1)))
        in_specs.append(pl.BlockSpec(b.shape, lambda i: (0, 0), pipeline_mode=pl.Buffered(1)))
        args.append(w)
        args.append(b)

    out = pl.pallas_call(
        _make_decoder_kernel(n_layers),
        out_shape=jax.ShapeDtypeStruct((n_pad, f_out_pad), x.dtype),
        grid=(num_blocks,),
        in_specs=in_specs,
        out_specs=pl.BlockSpec((block_rows, f_out_pad), lambda i: (i, 0)),
        compiler_params=pltpu.CompilerParams(
            dimension_semantics=("parallel",),
            vmem_limit_bytes=VMEM_BUDGET,
        ),
    )(*args)

    return out[:n, :out_features]


def decoder_forward_ref(x, params):
    """Pure-JAX f32 reference (unfolded BN, unpadded) matching PyTorch eval semantics."""
    out = x
    n_layers = len(params)
    for i, p in enumerate(params):
        out = out @ p["w"].T + p["b"]
        if i != n_layers - 1:
            out = (out - p["bn_mean"]) / jnp.sqrt(p["bn_var"] + BN_EPS)
            out = out * p["bn_gamma"] + p["bn_beta"]
            out = out * jax.nn.sigmoid(out)  # SiLU; dropout = identity (eval)
    return out


# ---------------------------------------------------------------------------
if __name__ == "__main__":
    key = jax.random.PRNGKey(0)
    kx, kp = jax.random.split(key)

    # Matches the spec's X = torch.randn(10, 20): batch=10, in_features=20.
    dimensions = [20, 64, 48, 16]
    batch = 10

    x = jax.random.normal(kx, (batch, dimensions[0]), jnp.float32)
    params = init_decoder_params(kp, dimensions)
    ws, bs = prepare_decoder_params(params)  # one-time host prep (fold + transpose + pad + bf16)

    out = decoder_forward_pallas(x, ws, bs, out_features=dimensions[-1])
    out = jax.block_until_ready(out)

    ref = decoder_forward_ref(x, params)
    assert out.shape == (batch, dimensions[-1])
    # bf16 matmul operands (f32 accumulation) -> looser tolerance vs. the f32 reference.
    assert jnp.allclose(out, ref, atol=5e-2, rtol=5e-2), "mismatch vs JAX reference"

    print("KERNEL_OK")
</pallas_src>

<mosaic_0001>
module attributes {stable_mosaic.version = 11 : i64} {
  func.func @kernel(%arg0: i32, %arg1: memref<16x20xf32, #tpu.memory_space<vmem>>, %arg2: memref<20x128xbf16, #tpu.memory_space<vmem>>, %arg3: memref<1x128xf32, #tpu.memory_space<vmem>>, %arg4: memref<128x128xbf16, #tpu.memory_space<vmem>>, %arg5: memref<1x128xf32, #tpu.memory_space<vmem>>, %arg6: memref<128x128xbf16, #tpu.memory_space<vmem>>, %arg7: memref<1x128xf32, #tpu.memory_space<vmem>>, %arg8: memref<16x128xf32, #tpu.memory_space<vmem>>) attributes {dimension_semantics = [#tpu.dimension_semantics<parallel>], iteration_bounds = array<i64: 1>, scalar_prefetch = 0 : i64, scratch_operands = 0 : i64, tpu.core_type = #tpu.core_type<tc>, window_params = [{transform_indices = @transform_0, window_bounds = array<i64: 16, 20>}, {pipeline_mode = #tpu.pipeline_mode<synchronous>, transform_indices = @transform_1, window_bounds = array<i64: 20, 128>}, {pipeline_mode = #tpu.pipeline_mode<synchronous>, transform_indices = @transform_2, window_bounds = array<i64: 1, 128>}, {pipeline_mode = #tpu.pipeline_mode<synchronous>, transform_indices = @transform_3, window_bounds = array<i64: 128, 128>}, {pipeline_mode = #tpu.pipeline_mode<synchronous>, transform_indices = @transform_4, window_bounds = array<i64: 1, 128>}, {pipeline_mode = #tpu.pipeline_mode<synchronous>, transform_indices = @transform_5, window_bounds = array<i64: 128, 128>}, {pipeline_mode = #tpu.pipeline_mode<synchronous>, transform_indices = @transform_6, window_bounds = array<i64: 1, 128>}, {transform_indices = @transform_7, window_bounds = array<i64: 16, 128>}]} {
    %c0 = arith.constant 0 : index
    %c0_0 = arith.constant 0 : index
    %0 = vector.load %arg1[%c0, %c0_0] : memref<16x20xf32, #tpu.memory_space<vmem>>, vector<16x20xf32>
    %c0_1 = arith.constant 0 : index
    %c0_2 = arith.constant 0 : index
    %1 = vector.load %arg2[%c0_1, %c0_2] : memref<20x128xbf16, #tpu.memory_space<vmem>>, vector<20x128xbf16>
    %c0_3 = arith.constant 0 : index
    %c0_4 = arith.constant 0 : index
    %2 = vector.load %arg3[%c0_3, %c0_4] : memref<1x128xf32, #tpu.memory_space<vmem>>, vector<1x128xf32>
    %3 = arith.truncf %0 : vector<16x20xf32> to vector<16x20xbf16>
    %cst = arith.constant dense<0.000000e+00> : vector<16x128xf32>
    %4 = tpu.matmul %3, %1, %cst {dimension_numbers = #tpu.dot_dimension_numbers<[1], [0], [0], [1], [0, 0, 1, 1], [], []>} : vector<16x20xbf16>, vector<20x128xbf16>, vector<16x128xf32> -> vector<16x128xf32>
    %5 = vector.broadcast %2 : vector<1x128xf32> to vector<16x128xf32>
    %6 = arith.addf %4, %5 : vector<16x128xf32>
    %7 = arith.negf %6 : vector<16x128xf32>
    %8 = math.exp %7 : vector<16x128xf32>
    %cst_5 = arith.constant 1.000000e+00 : f32
    %9 = vector.broadcast %cst_5 : f32 to vector<16x128xf32>
    %10 = arith.addf %9, %8 : vector<16x128xf32>
    %11 = arith.divf %9, %10 : vector<16x128xf32>
    %12 = arith.mulf %6, %11 : vector<16x128xf32>
    %c0_6 = arith.constant 0 : index
    %c0_7 = arith.constant 0 : index
    %13 = vector.load %arg4[%c0_6, %c0_7] : memref<128x128xbf16, #tpu.memory_space<vmem>>, vector<128x128xbf16>
    %c0_8 = arith.constant 0 : index
    %c0_9 = arith.constant 0 : index
    %14 = vector.load %arg5[%c0_8, %c0_9] : memref<1x128xf32, #tpu.memory_space<vmem>>, vector<1x128xf32>
    %15 = arith.truncf %12 : vector<16x128xf32> to vector<16x128xbf16>
    %cst_10 = arith.constant dense<0.000000e+00> : vector<16x128xf32>
    %16 = tpu.matmul %15, %13, %cst_10 {dimension_numbers = #tpu.dot_dimension_numbers<[1], [0], [0], [1], [0, 0, 1, 1], [], []>} : vector<16x128xbf16>, vector<128x128xbf16>, vector<16x128xf32> -> vector<16x128xf32>
    %17 = vector.broadcast %14 : vector<1x128xf32> to vector<16x128xf32>
    %18 = arith.addf %16, %17 : vector<16x128xf32>
    %19 = arith.negf %18 : vector<16x128xf32>
    %20 = math.exp %19 : vector<16x128xf32>
    %cst_11 = arith.constant 1.000000e+00 : f32
    %21 = vector.broadcast %cst_11 : f32 to vector<16x128xf32>
    %22 = arith.addf %21, %20 : vector<16x128xf32>
    %23 = arith.divf %21, %22 : vector<16x128xf32>
    %24 = arith.mulf %18, %23 : vector<16x128xf32>
    %c0_12 = arith.constant 0 : index
    %c0_13 = arith.constant 0 : index
    %25 = vector.load %arg6[%c0_12, %c0_13] : memref<128x128xbf16, #tpu.memory_space<vmem>>, vector<128x128xbf16>
    %c0_14 = arith.constant 0 : index
    %c0_15 = arith.constant 0 : index
    %26 = vector.load %arg7[%c0_14, %c0_15] : memref<1x128xf32, #tpu.memory_space<vmem>>, vector<1x128xf32>
    %27 = arith.truncf %24 : vector<16x128xf32> to vector<16x128xbf16>
    %cst_16 = arith.constant dense<0.000000e+00> : vector<16x128xf32>
    %28 = tpu.matmul %27, %25, %cst_16 {dimension_numbers = #tpu.dot_dimension_numbers<[1], [0], [0], [1], [0, 0, 1, 1], [], []>} : vector<16x128xbf16>, vector<128x128xbf16>, vector<16x128xf32> -> vector<16x128xf32>
    %29 = vector.broadcast %26 : vector<1x128xf32> to vector<16x128xf32>
    %30 = arith.addf %28, %29 : vector<16x128xf32>
    %c0_17 = arith.constant 0 : index
    %c0_18 = arith.constant 0 : index
    %31 = vector.load %arg8[%c0_17, %c0_18] : memref<16x128xf32, #tpu.memory_space<vmem>>, vector<16x128xf32>
    tpu.vector_store %arg8[%c0_17, %c0_18], %30 {strides = array<i32>} : memref<16x128xf32, #tpu.memory_space<vmem>>, vector<16x128xf32>,
    return
  }
  func.func @transform_0(%arg0: i32) -> (i32, i32) {
    %c0_i32 = arith.constant 0 : i32
    %c0_i32_0 = arith.constant 0 : i32
    return %arg0, %c0_i32 : i32, i32
  }
  func.func @transform_1(%arg0: i32) -> (i32, i32) {
    %c0_i32 = arith.constant 0 : i32
    %c0_i32_0 = arith.constant 0 : i32
    %c0_i32_1 = arith.constant 0 : i32
    return %c0_i32, %c0_i32_0 : i32, i32
  }
  func.func @transform_2(%arg0: i32) -> (i32, i32) {
    %c0_i32 = arith.constant 0 : i32
    %c0_i32_0 = arith.constant 0 : i32
    %c0_i32_1 = arith.constant 0 : i32
    return %c0_i32, %c0_i32_0 : i32, i32
  }
  func.func @transform_3(%arg0: i32) -> (i32, i32) {
    %c0_i32 = arith.constant 0 : i32
    %c0_i32_0 = arith.constant 0 : i32
    %c0_i32_1 = arith.constant 0 : i32
    return %c0_i32, %c0_i32_0 : i32, i32
  }
  func.func @transform_4(%arg0: i32) -> (i32, i32) {
    %c0_i32 = arith.constant 0 : i32
    %c0_i32_0 = arith.constant 0 : i32
    %c0_i32_1 = arith.constant 0 : i32
    return %c0_i32, %c0_i32_0 : i32, i32
  }
  func.func @transform_5(%arg0: i32) -> (i32, i32) {
    %c0_i32 = arith.constant 0 : i32
    %c0_i32_0 = arith.constant 0 : i32
    %c0_i32_1 = arith.constant 0 : i32
    return %c0_i32, %c0_i32_0 : i32, i32
  }
  func.func @transform_6(%arg0: i32) -> (i32, i32) {
    %c0_i32 = arith.constant 0 : i32
    %c0_i32_0 = arith.constant 0 : i32
    %c0_i32_1 = arith.constant 0 : i32
    return %c0_i32, %c0_i32_0 : i32, i32
  }
  func.func @transform_7(%arg0: i32) -> (i32, i32) {
    %c0_i32 = arith.constant 0 : i32
    %c0_i32_0 = arith.constant 0 : i32
    return %arg0, %c0_i32 : i32, i32
  }
}

</mosaic_0001>

<llo_original>
// kernel: decoder_forward_pallas.1
$region0: #{decoder_forward_pallas.1}
  #allocation0 [shape = 'u32[]', space=smem, size = 0x4, offset = 0x4, fixed_abs, tag = 'smem constant byte address 0x4 - core index']
  #allocation1 [shape = 'u32[144,128]{1,0:T(1,128)}', space=vmem, size = 0x12000, scoped, tag = 'internal scratch']
  %s0 = inlined_call_operand.vmem [shape: f32[16,20], index: 0, kind: input, shape index: {}]
  %s1 = inlined_call_operand.vmem [shape: bf16[20,128], index: 1, kind: input, shape index: {}]
  %s2 = inlined_call_operand.vmem [shape: f32[1,128], index: 2, kind: input, shape index: {}]
  %s3 = inlined_call_operand.hbm [shape: bf16[128,128], index: 3, kind: input, shape index: {}]
  %s4 = inlined_call_operand.vmem [shape: f32[1,128], index: 4, kind: input, shape index: {}]
  %s5 = inlined_call_operand.hbm [shape: bf16[128,128], index: 5, kind: input, shape index: {}]
  %s6 = inlined_call_operand.vmem [shape: f32[1,128], index: 6, kind: input, shape index: {}]
  %s7 = inlined_call_operand.hbm [shape: f32[16,128], index: 7, kind: output, shape index: {}]
  %s8 = sld [smem:[#allocation0]]
  $region46: #{decoder_forward_pallas.1} parent=0
    _
  %s10 = ssub.s32 1, %s8
  %s11 = scalar_select 0, %s10, %s8
  $region1: #{decoder_forward_pallas.1} parent=0
    #allocation2 [shape = 'u8[32768]{0}', space=vmem, size = 0x8000, scoped, tag = 'input window, operand 3, single buffered']
    #allocation3 [shape = 's32[1]{0}', space=sflag, size = 0x4, scoped, tag = 'scoped memory for decoder_forward_pallas.1']
    #allocation4 [shape = 's32[1]{0}', space=sflag, size = 0x4, scoped, tag = 'scoped memory for decoder_forward_pallas.1']
    #allocation5 [shape = 'u8[32768]{0}', space=vmem, size = 0x8000, scoped, tag = 'input window, operand 5, single buffered']
    #allocation6 [shape = 's32[1]{0}', space=sflag, size = 0x4, scoped, tag = 'scoped memory for decoder_forward_pallas.1']
    #allocation7 [shape = 'u8[8192]{0}', space=vmem, size = 0x2000, scoped, tag = 'output window, operand 0, single buffered']
    %12 = vsyncpa [#allocation3], 0
    %13 = vsyncpa [#allocation6], 0
    %14 = vsyncpa [#allocation4], 0
    // Predicated region
    $region2: #{decoder_forward_pallas.1} parent=1 // pred_check
      _
    $region3: #{decoder_forward_pallas.1} parent=1 // pred_check_branch
      %16 = sbr.rel (0) target = $region5
    $region4: #{decoder_forward_pallas.1} parent=1 // pred_region
      _
    $region5: #{decoder_forward_pallas.1} parent=1 // pred_fallthru
      _
    // Predicated region
    $region6: #{decoder_forward_pallas.1} parent=1 // pred_check
      _
    $region7: #{decoder_forward_pallas.1} parent=1 // pred_check_branch
      %18 = sbr.rel (0) target = $region9
    $region8: #{decoder_forward_pallas.1} parent=1 // pred_region
      _
    $region9: #{decoder_forward_pallas.1} parent=1 // pred_fallthru
      _
    // Predicated region
    $region10: #{decoder_forward_pallas.1} parent=1 // pred_check
      _
    $region11: #{decoder_forward_pallas.1} parent=1 // pred_check_branch
      %20 = sbr.rel (0) target = $region13
    $region12: #{decoder_forward_pallas.1} parent=1 // pred_region
      _
    $region13: #{decoder_forward_pallas.1} parent=1 // pred_fallthru
      _
    // Predicated region
    $region14: #{decoder_forward_pallas.1} parent=1 // pred_check
      _
    $region15: #{decoder_forward_pallas.1} parent=1 // pred_check_branch
      %22 = sbr.rel (0) target = $region17
    $region16: #{decoder_forward_pallas.1} parent=1 // pred_region
      %s24 = ssub.s32 1024, 1024
      %25 = vsyncadd [#allocation3], %s24
      %s26 = sshll.u32 [#allocation2], 4
      %s27 = int_to_ptr.vmem [resolvable:$true] %s26
      %32 = dma.hbm_to_vmem [thread:$0]  %s3, 1024, %s27, [#allocation3], 64, 64, 4
    $region17: #{decoder_forward_pallas.1} parent=1 // pred_fallthru
      _
    // Predicated region
    $region18: #{decoder_forward_pallas.1} parent=1 // pred_check
      _
    $region19: #{decoder_forward_pallas.1} parent=1 // pred_check_branch
      %34 = sbr.rel (0) target = $region21
    $region20: #{decoder_forward_pallas.1} parent=1 // pred_region
      _
    $region21: #{decoder_forward_pallas.1} parent=1 // pred_fallthru
      _
    // Predicated region
    $region22: #{decoder_forward_pallas.1} parent=1 // pred_check
      _
    $region23: #{decoder_forward_pallas.1} parent=1 // pred_check_branch
      %36 = sbr.rel (0) target = $region25
    $region24: #{decoder_forward_pallas.1} parent=1 // pred_region
      %s38 = ssub.s32 1024, 1024
      %39 = vsyncadd [#allocation6], %s38
      %s40 = sshll.u32 [#allocation5], 4
      %s41 = int_to_ptr.vmem [resolvable:$true] %s40
      %46 = dma.hbm_to_vmem [thread:$0]  %s5, 1024, %s41, [#allocation6], 64, 64, 4
    $region25: #{decoder_forward_pallas.1} parent=1 // pred_fallthru
      _
    // Predicated region
    $region26: #{decoder_forward_pallas.1} parent=1 // pred_check
      _
    $region27: #{decoder_forward_pallas.1} parent=1 // pred_check_branch
      %48 = sbr.rel (0) target = $region29
    $region28: #{decoder_forward_pallas.1} parent=1 // pred_region
      _
    $region29: #{decoder_forward_pallas.1} parent=1 // pred_fallthru
      _
    // Predicated region
    $region30: #{decoder_forward_pallas.1} parent=1 // pred_check
      _
    $region31: #{decoder_forward_pallas.1} parent=1 // pred_check_branch
      %50 = sbr.rel (0) target = $region33
    $region32: #{decoder_forward_pallas.1} parent=1 // pred_region
      %51 = dma.done [#allocation3], 1024
    $region33: #{decoder_forward_pallas.1} parent=1 // pred_fallthru
      _
    // Predicated region
    $region34: #{decoder_forward_pallas.1} parent=1 // pred_check
      _
    $region35: #{decoder_forward_pallas.1} parent=1 // pred_check_branch
      %53 = sbr.rel (0) target = $region37
    $region36: #{decoder_forward_pallas.1} parent=1 // pred_region
      %54 = dma.done [#allocation6], 1024
    $region37: #{decoder_forward_pallas.1} parent=1 // pred_fallthru
      _
    %v56 = vld [vmem:[%s0] sm:$0xff]
    %v57 = vld [vmem:[%s0 + $0x8] sm:$0xff]
    %v58 = vld [vmem:[%s1] sm:$0xf]
    %v59 = vld [vmem:[%s1 + $0x4] sm:$0xf]
    %v60 = vld [vmem:[%s1 + $0x8] sm:$0x3]
    %v61 = vld [vmem:[%s2] sm:$0x1]
    %v62 = vpack.c.bf16 %v57, %v56
    %v64 = vlaneseq
    %v65 = vshrl.u32 %v64, 7
    %v66 = vsub.s32 0, %v65
    %v67 = vrot.slane %v61, %v66
    %v72 = vunpack.c.l.b16 %v58
    %v73 = vunpack.c.l.b16 %v59
    %v74 = vunpack.c.l.b16 %v60
    %v75 = vpack.c.b16 %v73, %v72
    %v76 = vpack.c.b16 %v74, %v74
    %vm78 = vcmask 162816
    %v80 = vsel %vm78, %v62, 0
    %vm82 = vcmask 1041408
    %v84 = vsel %vm82, %v76, 0
    %86 = vmatprep.subr.bf16.mxu0 0
    %87 = vmatpush1.bf16.msra.mxu0 %v75
    %88 = vmatprep.subr.bf16.mxu0 0
    %89 = vmatpush1.bf16.msra.mxu0 %v84
    %90 = vmatprep.subr.bf16.mxu0 0
    %91 = vmatpush1.bf16.msra.mxu0 0
    %92 = vmatprep.subr.bf16.mxu0 0
    %93 = vmatpush1.bf16.msra.mxu0 0
    %94 = vmatprep.subr.bf16.mxu0 0
    %95 = vmatpush1.bf16.msra.mxu0 0
    %96 = vmatprep.subr.bf16.mxu0 0
    %97 = vmatpush1.bf16.msra.mxu0 0
    %98 = vmatprep.subr.bf16.mxu0 0
    %99 = vmatpush1.bf16.msra.mxu0 0
    %100 = vmatprep.subr.bf16.mxu0 0
    %101 = vmatpush1.bf16.msra.mxu0 0
    %102 = vmatprep.subr.bf16.mxu0 0
    %103 = vmatpush1.bf16.msra.mxu0 0
    %104 = vmatprep.subr.bf16.mxu0 0
    %105 = vmatpush1.bf16.msra.mxu0 0
    %106 = vmatprep.subr.bf16.mxu0 0
    %107 = vmatpush1.bf16.msra.mxu0 0
    %108 = vmatprep.subr.bf16.mxu0 0
    %109 = vmatpush1.bf16.msra.mxu0 0
    %110 = vmatprep.subr.bf16.mxu0 0
    %111 = vmatpush1.bf16.msra.mxu0 0
    %112 = vmatprep.subr.bf16.mxu0 0
    %113 = vmatpush1.bf16.msra.mxu0 0
    %114 = vmatprep.subr.bf16.mxu0 0
    %115 = vmatpush1.bf16.msra.mxu0 0
    %116 = vmatprep.subr.bf16.mxu0 0
    %117 = vmatpush1.bf16.msra.mxu0 0
    %118 = vmatprep.mubr.bf16.mxu0 0
    %119 = vmatmul.mubr.bf16.gmra.mrb[0].mxu0 %v80
    %v120 = vpop.f32.mrb[0].mxu0
    %v121 = vadd.f32 %v67, %v120
    %v122 = vpop.f32.mrb[0].mxu0
    %v123 = vpop.f32.mrb[0].mxu0
    %v124 = vadd.f32 %v67, %v123
    %v125 = vpop.f32.mrb[0].mxu0
    %126 = vdwg.mxu0
    %v127 = vxor.u32 %v121, 2147483648
    %v128 = vxor.u32 %v124, 2147483648
    %v129 = vmul.f32 %v127, 1.442695
    %v130 = vpow.pop %v129
    %v131 = vmul.f32 %v128, 1.442695
    %v132 = vpow.pop %v131
    %v133 = vadd.f32 %v130, 1.0
    %v134 = vadd.f32 %v132, 1.0
    %v135 = vrcp.pop %v133
    %v136 = vmul.f32 1.0, %v135
    %v137 = vrcp.pop %v134
    %v138 = vmul.f32 1.0, %v137
    %v139 = vmul.f32 %v121, %v136
    %v140 = vmul.f32 %v124, %v138
    %v141 = vld [vmem:[#allocation2] sm:$0xf]
    %v142 = vld [vmem:[#allocation2 + $0x4] sm:$0xf]
    %v143 = vld [vmem:[#allocation2 + $0x8] sm:$0xf]
    %v144 = vld [vmem:[#allocation2 + $0xc] sm:$0xf]
    %v145 = vld [vmem:[#allocation2 + $0x10] sm:$0xf]
    %v146 = vld [vmem:[#allocation2 + $0x14] sm:$0xf]
    %v147 = vld [vmem:[#allocation2 + $0x18] sm:$0xf]
    %v148 = vld [vmem:[#allocation2 + $0x1c] sm:$0xf]
    %v149 = vld [vmem:[#allocation2 + $0x20] sm:$0xf]
    %v150 = vld [vmem:[#allocation2 + $0x24] sm:$0xf]
    %v151 = vld [vmem:[#allocation2 + $0x28] sm:$0xf]
    %v152 = vld [vmem:[#allocation2 + $0x2c] sm:$0xf]
    %v153 = vld [vmem:[#allocation2 + $0x30] sm:$0xf]
    %v154 = vld [vmem:[#allocation2 + $0x34] sm:$0xf]
    %v155 = vld [vmem:[#allocation2 + $0x38] sm:$0xf]
    %v156 = vld [vmem:[#allocation2 + $0x3c] sm:$0xf]
    %v157 = vld [vmem:[%s4] sm:$0x1]
    %v158 = vpack.c.bf16 %v140, %v139
    %v160 = vlaneseq
    %v161 = vshrl.u32 %v160, 7
    %v162 = vsub.s32 0, %v161
    %v163 = vrot.slane %v157, %v162
    %v181 = vunpack.c.l.b16 %v141
    %v182 = vunpack.c.l.b16 %v142
    %v183 = vunpack.c.l.b16 %v143
    %v184 = vunpack.c.l.b16 %v144
    %v185 = vunpack.c.l.b16 %v145
    %v186 = vunpack.c.l.b16 %v146
    %v187 = vunpack.c.l.b16 %v147
    %v188 = vunpack.c.l.b16 %v148
    %v189 = vunpack.c.l.b16 %v149
    %v190 = vunpack.c.l.b16 %v150
    %v191 = vunpack.c.l.b16 %v151
    %v192 = vunpack.c.l.b16 %v152
    %v193 = vunpack.c.l.b16 %v153
    %v194 = vunpack.c.l.b16 %v154
    %v195 = vunpack.c.l.b16 %v155
    %v196 = vunpack.c.l.b16 %v156
    %v197 = vpack.c.b16 %v182, %v181
    %v198 = vpack.c.b16 %v184, %v183
    %v199 = vpack.c.b16 %v186, %v185
    %v200 = vpack.c.b16 %v188, %v187
    %v201 = vpack.c.b16 %v190, %v189
    %v202 = vpack.c.b16 %v192, %v191
    %v203 = vpack.c.b16 %v194, %v193
    %v204 = vpack.c.b16 %v196, %v195
    %213 = vmatprep.subr.bf16.mxu0 0
    %214 = vmatpush1.bf16.msra.mxu0 %v197
    %215 = vmatprep.subr.bf16.mxu0 0
    %216 = vmatpush1.bf16.msra.mxu0 %v198
    %217 = vmatprep.subr.bf16.mxu0 0
    %218 = vmatpush1.bf16.msra.mxu0 %v199
    %219 = vmatprep.subr.bf16.mxu0 0
    %220 = vmatpush1.bf16.msra.mxu0 %v200
    %221 = vmatprep.subr.bf16.mxu0 0
    %222 = vmatpush1.bf16.msra.mxu0 %v201
    %223 = vmatprep.subr.bf16.mxu0 0
    %224 = vmatpush1.bf16.msra.mxu0 %v202
    %225 = vmatprep.subr.bf16.mxu0 0
    %226 = vmatpush1.bf16.msra.mxu0 %v203
    %227 = vmatprep.subr.bf16.mxu0 0
    %228 = vmatpush1.bf16.msra.mxu0 %v204
    %229 = vmatprep.subr.bf16.mxu0 0
    %230 = vmatpush1.bf16.msra.mxu0 0
    %231 = vmatprep.subr.bf16.mxu0 0
    %232 = vmatpush1.bf16.msra.mxu0 0
    %233 = vmatprep.subr.bf16.mxu0 0
    %234 = vmatpush1.bf16.msra.mxu0 0
    %235 = vmatprep.subr.bf16.mxu0 0
    %236 = vmatpush1.bf16.msra.mxu0 0
    %237 = vmatprep.subr.bf16.mxu0 0
    %238 = vmatpush1.bf16.msra.mxu0 0
    %239 = vmatprep.subr.bf16.mxu0 0
    %240 = vmatpush1.bf16.msra.mxu0 0
    %241 = vmatprep.subr.bf16.mxu0 0
    %242 = vmatpush1.bf16.msra.mxu0 0
    %243 = vmatprep.subr.bf16.mxu0 0
    %244 = vmatpush1.bf16.msra.mxu0 0
    %245 = vmatprep.mubr.bf16.mxu0 0
    %246 = vmatmul.mubr.bf16.gmra.mrb[0].mxu0 %v158
    %v247 = vpop.f32.mrb[0].mxu0
    %v248 = vadd.f32 %v163, %v247
    %v249 = vpop.f32.mrb[0].mxu0
    %v250 = vpop.f32.mrb[0].mxu0
    %v251 = vadd.f32 %v163, %v250
    %v252 = vpop.f32.mrb[0].mxu0
    %253 = vdwg.mxu0
    %v254 = vxor.u32 %v248, 2147483648
    %v255 = vxor.u32 %v251, 2147483648
    %v256 = vmul.f32 %v254, 1.442695
    %v257 = vpow.pop %v256
    %v258 = vmul.f32 %v255, 1.442695
    %v259 = vpow.pop %v258
    %v260 = vadd.f32 %v257, 1.0
    %v261 = vadd.f32 %v259, 1.0
    %v262 = vrcp.pop %v260
    %v263 = vmul.f32 1.0, %v262
    %v264 = vrcp.pop %v261
    %v265 = vmul.f32 1.0, %v264
    %v266 = vmul.f32 %v248, %v263
    %v267 = vmul.f32 %v251, %v265
    %v268 = vld [vmem:[#allocation5] sm:$0xf]
    %v269 = vld [vmem:[#allocation5 + $0x4] sm:$0xf]
    %v270 = vld [vmem:[#allocation5 + $0x8] sm:$0xf]
    %v271 = vld [vmem:[#allocation5 + $0xc] sm:$0xf]
    %v272 = vld [vmem:[#allocation5 + $0x10] sm:$0xf]
    %v273 = vld [vmem:[#allocation5 + $0x14] sm:$0xf]
    %v274 = vld [vmem:[#allocation5 + $0x18] sm:$0xf]
    %v275 = vld [vmem:[#allocation5 + $0x1c] sm:$0xf]
    %v276 = vld [vmem:[#allocation5 + $0x20] sm:$0xf]
    %v277 = vld [vmem:[#allocation5 + $0x24] sm:$0xf]
    %v278 = vld [vmem:[#allocation5 + $0x28] sm:$0xf]
    %v279 = vld [vmem:[#allocation5 + $0x2c] sm:$0xf]
    %v280 = vld [vmem:[#allocation5 + $0x30] sm:$0xf]
    %v281 = vld [vmem:[#allocation5 + $0x34] sm:$0xf]
    %v282 = vld [vmem:[#allocation5 + $0x38] sm:$0xf]
    %v283 = vld [vmem:[#allocation5 + $0x3c] sm:$0xf]
    %v284 = vld [vmem:[%s6] sm:$0x1]
    %v285 = vpack.c.bf16 %v267, %v266
    %v287 = vlaneseq
    %v288 = vshrl.u32 %v287, 7
    %v289 = vsub.s32 0, %v288
    %v290 = vrot.slane %v284, %v289
    %v308 = vunpack.c.l.b16 %v268
    %v309 = vunpack.c.l.b16 %v269
    %v310 = vunpack.c.l.b16 %v270
    %v311 = vunpack.c.l.b16 %v271
    %v312 = vunpack.c.l.b16 %v272
    %v313 = vunpack.c.l.b16 %v273
    %v314 = vunpack.c.l.b16 %v274
    %v315 = vunpack.c.l.b16 %v275
    %v316 = vunpack.c.l.b16 %v276
    %v317 = vunpack.c.l.b16 %v277
    %v318 = vunpack.c.l.b16 %v278
    %v319 = vunpack.c.l.b16 %v279
    %v320 = vunpack.c.l.b16 %v280
    %v321 = vunpack.c.l.b16 %v281
    %v322 = vunpack.c.l.b16 %v282
    %v323 = vunpack.c.l.b16 %v283
    %v324 = vpack.c.b16 %v309, %v308
    %v325 = vpack.c.b16 %v311, %v310
    %v326 = vpack.c.b16 %v313, %v312
    %v327 = vpack.c.b16 %v315, %v314
    %v328 = vpack.c.b16 %v317, %v316
    %v329 = vpack.c.b16 %v319, %v318
    %v330 = vpack.c.b16 %v321, %v320
    %v331 = vpack.c.b16 %v323, %v322
    %340 = vmatprep.subr.bf16.mxu0 0
    %341 = vmatpush1.bf16.msra.mxu0 %v324
    %342 = vmatprep.subr.bf16.mxu0 0
    %343 = vmatpush1.bf16.msra.mxu0 %v325
    %344 = vmatprep.subr.bf16.mxu0 0
    %345 = vmatpush1.bf16.msra.mxu0 %v326
    %346 = vmatprep.subr.bf16.mxu0 0
    %347 = vmatpush1.bf16.msra.mxu0 %v327
    %348 = vmatprep.subr.bf16.mxu0 0
    %349 = vmatpush1.bf16.msra.mxu0 %v328
    %350 = vmatprep.subr.bf16.mxu0 0
    %351 = vmatpush1.bf16.msra.mxu0 %v329
    %352 = vmatprep.subr.bf16.mxu0 0
    %353 = vmatpush1.bf16.msra.mxu0 %v330
    %354 = vmatprep.subr.bf16.mxu0 0
    %355 = vmatpush1.bf16.msra.mxu0 %v331
    %356 = vmatprep.subr.bf16.mxu0 0
    %357 = vmatpush1.bf16.msra.mxu0 0
    %358 = vmatprep.subr.bf16.mxu0 0
    %359 = vmatpush1.bf16.msra.mxu0 0
    %360 = vmatprep.subr.bf16.mxu0 0
    %361 = vmatpush1.bf16.msra.mxu0 0
    %362 = vmatprep.subr.bf16.mxu0 0
    %363 = vmatpush1.bf16.msra.mxu0 0
    %364 = vmatprep.subr.bf16.mxu0 0
    %365 = vmatpush1.bf16.msra.mxu0 0
    %366 = vmatprep.subr.bf16.mxu0 0
    %367 = vmatpush1.bf16.msra.mxu0 0
    %368 = vmatprep.subr.bf16.mxu0 0
    %369 = vmatpush1.bf16.msra.mxu0 0
    %370 = vmatprep.subr.bf16.mxu0 0
    %371 = vmatpush1.bf16.msra.mxu0 0
    %372 = vmatprep.mubr.bf16.mxu0 0
    %373 = vmatmul.mubr.bf16.gmra.mrb[0].mxu0 %v285
    %v374 = vpop.f32.mrb[0].mxu0
    %v375 = vadd.f32 %v290, %v374
    %v376 = vpop.f32.mrb[0].mxu0
    %v377 = vpop.f32.mrb[0].mxu0
    %v378 = vadd.f32 %v290, %v377
    %v379 = vpop.f32.mrb[0].mxu0
    %380 = vdwg.mxu0
    %381 = vst [vmem:[#allocation7] sm:$0xff] %v375
    %382 = vst [vmem:[#allocation7 + $0x8] sm:$0xff] %v378
    // Predicated region
    $region38: #{decoder_forward_pallas.1} parent=1 // pred_check
      _
    $region39: #{decoder_forward_pallas.1} parent=1 // pred_check_branch
      %384 = sbr.rel (0) target = $region41
    $region40: #{decoder_forward_pallas.1} parent=1 // pred_region
      %s386 = ssub.s32 256, 256
      %387 = vsyncadd [#allocation4], %s386
      %s388 = sshll.u32 [#allocation7], 4
      %s389 = int_to_ptr.vmem [resolvable:$true] %s388
      %394 = dma.vmem_to_hbm [thread:$0]  %s389, 256, %s7, [#allocation4], 128, 128, 8
    $region41: #{decoder_forward_pallas.1} parent=1 // pred_fallthru
      _
    // Predicated region
    $region42: #{decoder_forward_pallas.1} parent=1 // pred_check
      _
    $region43: #{decoder_forward_pallas.1} parent=1 // pred_check_branch
      %396 = sbr.rel (0) target = $region45
    $region44: #{decoder_forward_pallas.1} parent=1 // pred_region
      %397 = dma.done [#allocation4], 256
    $region45: #{decoder_forward_pallas.1} parent=1 // pred_fallthru
      _
    %398 = vsyncpa [#allocation3], 1
    %399 = vsyncpa [#allocation6], 1
    %400 = vsyncpa [#allocation4], 1

</llo_original>
